<compile_context>
chip_gen: v7x
topology: tpu7x:2x2x1
jax: 0.10.0
libtpu: 0.0.40
codegen_flags: <defaults>
</compile_context>

<pallas_src>
import functools

import jax
import jax.numpy as jnp
from jax.experimental import pallas as pl
from jax.experimental.pallas import tpu as pltpu


# ----------------------------- kernel body ----------------------------------


def _rmsnorm_kernel(x_ref, w_ref, o_ref, *, eps, inv_d, low_precision):
    # x_ref: (block_rows, d_pad), w_ref: (1, d_pad), o_ref: (block_rows, d_pad)
    x = x_ref[...]
    # Reduction (sum of squares -> mean -> rsqrt) always in f32 for accuracy.
    # Use sum * (1/true_d): d may be zero-padded to a multiple of 128, so the
    # padded columns contribute 0 to the sum and the divisor is the true d.
    xf = x.astype(jnp.float32)
    ms = jnp.sum(xf * xf, axis=-1, keepdims=True) * inv_d   # (block_rows, 1)
    inv = jax.lax.rsqrt(ms + eps)                            # f32, EUP

    if low_precision and x.dtype != jnp.float32:
        # v6e/v7x: keep the big (block_rows, d) elementwise work in the input
        # dtype (native bf16 VALU), only the tiny (rows, 1) inv is downcast.
        o_ref[...] = (
            w_ref[...].astype(x.dtype) * x * inv.astype(x.dtype)
        ).astype(o_ref.dtype)
    else:
        # f32 path: f32 inputs, or sub-32-bit inputs on chips without a bf16
        # VALU (v5e) / unknown chips.  Kernel is HBM-bound, so this is free.
        o_ref[...] = (w_ref[...].astype(jnp.float32) * xf * inv).astype(o_ref.dtype)


# --------------------------- sizing heuristics -------------------------------


def _sublane_multiple(dtype):
    itemsize = jnp.dtype(dtype).itemsize
    return max(8, 32 // itemsize)  # f32 -> 8, bf16 -> 16, int8/fp8 -> 32


def _device_info():
    """Returns (vmem_capacity_bytes, num_tensorcores, bf16_valu_ok)."""
    kind = ""
    try:
        kind = jax.devices()[0].device_kind.lower()
    except Exception:  # pragma: no cover - defensive
        pass

    vmem_cap = None
    try:
        vmem_cap = int(pltpu.get_tpu_info().vmem_capacity_bytes)
    except Exception:  # pragma: no cover - defensive
        vmem_cap = None

    is_v7x_like = "7" in kind
    if vmem_cap is None:
        if is_v7x_like or not kind:
            vmem_cap = 64 << 20      # conservative (v7x has 64 MiB per TC)
        else:
            vmem_cap = 128 << 20     # v5e / v6e

    num_tc = 2 if is_v7x_like else 1
    # bf16 VALU exists on v6e / v7x; v5e (and older / unknown) widen anyway.
    bf16_valu_ok = any(tag in kind for tag in ("v6", "v7", "7x"))
    return vmem_cap, num_tc, bf16_valu_ok


def _choose_block_rows(rows, d, dtype, *, target_x_tile_bytes,
                       vmem_budget_bytes, num_tc):
    """Biggest row-block whose double-buffered in/out tiles (+ f32 temps) fit
    the budget, ~target-sized input tile, sublane-aligned, and split so every
    TensorCore gets at least one block."""
    itemsize = jnp.dtype(dtype).itemsize
    mult = _sublane_multiple(dtype)
    row_bytes = d * itemsize

    br = max(mult, target_x_tile_bytes // row_bytes)

    # 2x input tile + 2x output tile (native dtype) + ~2 f32 rows of temporaries
    # (the f32 cast of x in the low-precision path / the squared temp).  Do NOT
    # shrink the f32 term when raising budgets, or the compiler spills.
    per_row_vmem = 4 * row_bytes + 2 * d * 4
    br = min(br, max(mult, vmem_budget_bytes // per_row_vmem))

    rows_rounded = -(-rows // mult) * mult

    # Multi-TC parts: ensure the "parallel" grid axis has >= 2 blocks whenever
    # the row count allows it, so both TensorCores get work.
    if num_tc >= 2 and rows_rounded >= 2 * mult:
        half = -(-rows // 2)
        half_rounded = -(-half // mult) * mult
        br = min(br, half_rounded)

    # No point exceeding the (sublane-rounded-up) total row count.
    br = min(br, rows_rounded)
    # Round down to the sublane multiple.
    br = max(mult, (br // mult) * mult)
    return int(br)


# ------------------------------- wrapper -------------------------------------


def rmsnorm(x, w, eps=1e-6, block_rows=None):
    """RMSNorm over the last axis of x, scaled by w (shape (d,)).

    out = w * x * rsqrt(mean(x**2, axis=-1, keepdims=True) + eps)
    """
    orig_shape = x.shape
    d = orig_shape[-1]
    rows = 1
    for s in orig_shape[:-1]:
        rows *= s

    x2 = x.reshape(rows, d)
    w2 = w.reshape(1, d)

    # Lane-dense last dim: pad to a multiple of 128 so output stores are
    # unmasked full-rate vst (never triggers for real model dims).
    d_pad = -(-d // 128) * 128
    if d_pad != d:
        x2 = jnp.pad(x2, ((0, 0), (0, d_pad - d)))
        w2 = jnp.pad(w2, ((0, 0), (0, d_pad - d)))

    vmem_cap, num_tc, bf16_valu_ok = _device_info()
    # Leave >= 16 MiB headroom of physical VMEM, never exceed 64 MiB scoped.
    vmem_limit = max(32 << 20, min(vmem_cap - (16 << 20), 64 << 20))
    vmem_budget = (vmem_limit * 3) // 4
    # Faster HBM (v7x-like parts) hides less per-step overhead -> bigger tiles.
    target_tile = (6 << 20) if vmem_cap <= (64 << 20) else (4 << 20)

    if block_rows is None:
        block_rows = _choose_block_rows(
            rows, d_pad, x.dtype,
            target_x_tile_bytes=target_tile,
            vmem_budget_bytes=vmem_budget,
            num_tc=num_tc,
        )

    # No row padding: the ragged last block is handled by Pallas partial-block
    # semantics (row-independent compute makes this safe).
    n_blocks = pl.cdiv(rows, block_rows)

    kernel = functools.partial(
        _rmsnorm_kernel,
        eps=float(eps),
        inv_d=1.0 / float(d),            # true d, not the padded one
        low_precision=bool(bf16_valu_ok),
    )

    out = pl.pallas_call(
        kernel,
        out_shape=jax.ShapeDtypeStruct((rows, d_pad), x.dtype),
        grid_spec=pltpu.PrefetchScalarGridSpec(
            num_scalar_prefetch=0,
            grid=(n_blocks,),
            in_specs=[
                pl.BlockSpec((block_rows, d_pad), lambda i: (i, 0)),
                # w is reused every step (constant index map); its double-buffer
                # cost is only 2*d_pad*itemsize, so no special pipeline_mode.
                pl.BlockSpec((1, d_pad), lambda i: (0, 0)),
            ],
            out_specs=pl.BlockSpec((block_rows, d_pad), lambda i: (i, 0)),
        ),
        compiler_params=pltpu.CompilerParams(
            # "parallel" lets v7x shard row-blocks across its 2 TensorCores.
            dimension_semantics=("parallel",),
            vmem_limit_bytes=int(vmem_limit),
        ),
    )(x2, w2)

    if d_pad != d:
        out = out[:, :d]
    return out.reshape(orig_shape)


def rmsnorm_ref(x, w, eps=1e-6):
    ms = jnp.mean(x.astype(jnp.float32) ** 2, axis=-1, keepdims=True)
    return (w * x * jax.lax.rsqrt(ms + eps)).astype(x.dtype)


if __name__ == "__main__":
    key = jax.random.PRNGKey(0)
    k0, k1 = jax.random.split(key)

    # Primary check: f32, small shape consistent with the module (batch, seq, d).
    # d=32 also exercises the lane-dense padding (d -> 128) path.
    batch, seq, d = 2, 8, 32
    x = jax.random.normal(k0, (batch, seq, d), dtype=jnp.float32)
    # Parameter init matches nn.Parameter(torch.ones(d)); perturb deterministically
    # so the scale actually matters in the check.
    w = jnp.ones((d,), dtype=jnp.float32) + 0.01 * jnp.arange(d, dtype=jnp.float32)

    out = rmsnorm(x, w)
    jax.block_until_ready(out)
    ref = rmsnorm_ref(x, w)
    assert out.shape == x.shape and out.dtype == x.dtype
    assert jnp.allclose(out, ref, atol=1e-5, rtol=1e-5), "f32 mismatch vs reference"

    # Secondary check: bf16 + ragged row count (15 rows) exercises the
    # partial-last-block path and the (generation-gated) low-precision path,
    # with a lane-dense d (256, no padding).
    d2 = 256
    xb = jax.random.normal(k1, (3, 5, d2), dtype=jnp.bfloat16)
    wb = (jnp.ones((d2,)) + 0.01 * jnp.arange(d2)).astype(jnp.bfloat16)
    outb = rmsnorm(xb, wb)
    jax.block_until_ready(outb)
    refb = rmsnorm_ref(xb, wb)
    assert outb.shape == xb.shape and outb.dtype == xb.dtype
    assert jnp.allclose(outb.astype(jnp.float32), refb.astype(jnp.float32),
                        atol=3e-2, rtol=3e-2), "bf16 mismatch vs reference"

    print("KERNEL_OK")
</pallas_src>

<mosaic_0001>
module attributes {stable_mosaic.version = 11 : i64} {
  func.func @_rmsnorm_kernel(%arg0: i32, %arg1: memref<16x128xf32, #tpu.memory_space<vmem>>, %arg2: memref<1x128xf32, #tpu.memory_space<vmem>>, %arg3: memref<16x128xf32, #tpu.memory_space<vmem>>) attributes {dimension_semantics = [#tpu.dimension_semantics<parallel>], iteration_bounds = array<i64: 1>, scalar_prefetch = 0 : i64, scratch_operands = 0 : i64, tpu.core_type = #tpu.core_type<tc>, window_params = [{transform_indices = @transform_0, window_bounds = array<i64: 16, 128>}, {pipeline_mode = #tpu.pipeline_mode<synchronous>, transform_indices = @transform_1, window_bounds = array<i64: 1, 128>}, {transform_indices = @transform_2, window_bounds = array<i64: 16, 128>}]} {
    %c0 = arith.constant 0 : index
    %c0_0 = arith.constant 0 : index
    %0 = vector.load %arg1[%c0, %c0_0] : memref<16x128xf32, #tpu.memory_space<vmem>>, vector<16x128xf32>
    %1 = arith.mulf %0, %0 : vector<16x128xf32>
    %cst = arith.constant dense<0.000000e+00> : vector<16xf32>
    %2 = vector.multi_reduction <add>, %1, %cst [1] : vector<16x128xf32> to vector<16xf32>
    %3 = vector.shape_cast %2 : vector<16xf32> to vector<16x1xf32>
    %cst_1 = arith.constant 3.125000e-02 : f32
    %4 = vector.broadcast %cst_1 : f32 to vector<16x1xf32>
    %5 = arith.mulf %3, %4 : vector<16x1xf32>
    %cst_2 = arith.constant 9.99999997E-7 : f32
    %6 = vector.broadcast %cst_2 : f32 to vector<16x1xf32>
    %7 = arith.addf %5, %6 : vector<16x1xf32>
    %8 = math.rsqrt %7 : vector<16x1xf32>
    %c0_3 = arith.constant 0 : index
    %c0_4 = arith.constant 0 : index
    %9 = vector.load %arg2[%c0_3, %c0_4] : memref<1x128xf32, #tpu.memory_space<vmem>>, vector<1x128xf32>
    %10 = vector.broadcast %9 : vector<1x128xf32> to vector<16x128xf32>
    %11 = arith.mulf %10, %0 : vector<16x128xf32>
    %12 = vector.broadcast %8 : vector<16x1xf32> to vector<16x128xf32>
    %13 = arith.mulf %11, %12 : vector<16x128xf32>
    %c0_5 = arith.constant 0 : index
    %c0_6 = arith.constant 0 : index
    %14 = vector.load %arg3[%c0_5, %c0_6] : memref<16x128xf32, #tpu.memory_space<vmem>>, vector<16x128xf32>
    tpu.vector_store %arg3[%c0_5, %c0_6], %13 {strides = array<i32>} : memref<16x128xf32, #tpu.memory_space<vmem>>, vector<16x128xf32>,
    return
  }
  func.func @transform_0(%arg0: i32) -> (i32, i32) {
    %c0_i32 = arith.constant 0 : i32
    %c0_i32_0 = arith.constant 0 : i32
    return %arg0, %c0_i32 : i32, i32
  }
  func.func @transform_1(%arg0: i32) -> (i32, i32) {
    %c0_i32 = arith.constant 0 : i32
    %c0_i32_0 = arith.constant 0 : i32
    %c0_i32_1 = arith.constant 0 : i32
    return %c0_i32, %c0_i32_0 : i32, i32
  }
  func.func @transform_2(%arg0: i32) -> (i32, i32) {
    %c0_i32 = arith.constant 0 : i32
    %c0_i32_0 = arith.constant 0 : i32
    return %arg0, %c0_i32 : i32, i32
  }
}

</mosaic_0001>

<llo_original>
// kernel: tpu_custom_call.1
$region0: #{tpu_custom_call.1}
  #allocation0 [shape = 'u32[]', space=smem, size = 0x4, offset = 0x4, fixed_abs, tag = 'smem constant byte address 0x4 - core index']
  #allocation1 [shape = 'u32[144,128]{1,0:T(1,128)}', space=vmem, size = 0x12000, scoped, tag = 'internal scratch']
  %s0 = inlined_call_operand.hbm [shape: f32[16,128], index: 0, kind: input, shape index: {}]
  %s1 = inlined_call_operand.hbm [shape: f32[1,128], index: 1, kind: input, shape index: {}]
  %s2 = inlined_call_operand.hbm [shape: f32[16,128], index: 2, kind: output, shape index: {}]
  %s3 = sld [smem:[#allocation0]]
  $region26: #{tpu_custom_call.1} parent=0
    _
  %s5 = ssub.s32 1, %s3
  %s6 = scalar_select 0, %s5, %s3
  $region1: #{tpu_custom_call.1} parent=0
    #allocation2 [shape = 'u8[8192]{0}', space=vmem, size = 0x2000, scoped, tag = 'input window, operand 0, single buffered']
    #allocation3 [shape = 's32[1]{0}', space=sflag, size = 0x4, scoped, tag = 'scoped memory for tpu_custom_call.1']
    #allocation4 [shape = 's32[1]{0}', space=sflag, size = 0x4, scoped, tag = 'scoped memory for tpu_custom_call.1']
    #allocation5 [shape = 'u8[512]{0}', space=vmem, size = 0x400, scoped, tag = 'input window, operand 1, single buffered']
    #allocation6 [shape = 's32[1]{0}', space=sflag, size = 0x4, scoped, tag = 'scoped memory for tpu_custom_call.1']
    #allocation7 [shape = 'u8[8192]{0}', space=vmem, size = 0x2000, scoped, tag = 'output window, operand 0, single buffered']
    %7 = vsyncpa [#allocation3], 0
    %8 = vsyncpa [#allocation6], 0
    %9 = vsyncpa [#allocation4], 0
    // Predicated region
    $region2: #{tpu_custom_call.1} parent=1 // pred_check
      _
    $region3: #{tpu_custom_call.1} parent=1 // pred_check_branch
      %11 = sbr.rel (0) target = $region5
    $region4: #{tpu_custom_call.1} parent=1 // pred_region
      %s13 = ssub.s32 256, 256
      %14 = vsyncadd [#allocation3], %s13
      %s15 = sshll.u32 [#allocation2], 4
      %s16 = int_to_ptr.vmem [resolvable:$true] %s15
      %21 = dma.hbm_to_vmem [thread:$0]  %s0, 256, %s16, [#allocation3], 128, 128, 8
    $region5: #{tpu_custom_call.1} parent=1 // pred_fallthru
      _
    // Predicated region
    $region6: #{tpu_custom_call.1} parent=1 // pred_check
      _
    $region7: #{tpu_custom_call.1} parent=1 // pred_check_branch
      %23 = sbr.rel (0) target = $region9
    $region8: #{tpu_custom_call.1} parent=1 // pred_region
      %s25 = ssub.s32 16, 16
      %26 = vsyncadd [#allocation6], %s25
      %s28 = sshll.u32 [#allocation5], 4
      %s29 = int_to_ptr.vmem [resolvable:$true] %s28
      %31 = dma.hbm_to_vmem [thread:$0]  %s1, 16, %s29, [#allocation6]
    $region9: #{tpu_custom_call.1} parent=1 // pred_fallthru
      _
    // Predicated region
    $region10: #{tpu_custom_call.1} parent=1 // pred_check
      _
    $region11: #{tpu_custom_call.1} parent=1 // pred_check_branch
      %33 = sbr.rel (0) target = $region13
    $region12: #{tpu_custom_call.1} parent=1 // pred_region
      %34 = dma.done [#allocation3], 256
    $region13: #{tpu_custom_call.1} parent=1 // pred_fallthru
      _
    // Predicated region
    $region14: #{tpu_custom_call.1} parent=1 // pred_check
      _
    $region15: #{tpu_custom_call.1} parent=1 // pred_check_branch
      %36 = sbr.rel (0) target = $region17
    $region16: #{tpu_custom_call.1} parent=1 // pred_region
      %37 = dma.done [#allocation6], 16
    $region17: #{tpu_custom_call.1} parent=1 // pred_fallthru
      _
    %v38 = vld [vmem:[#allocation2] sm:$0xff]
    %v39 = vld [vmem:[#allocation2 + $0x8] sm:$0xff]
    %v40 = vmul.f32 %v38, %v38
    %v41 = vmul.f32 %v39, %v39
    %42 = vadd.xlane.f32.xlu0 %v40
    %v43 = vpop.xlane.xlu0 %42
    %44 = vadd.xlane.f32.xlu0 %v41
    %v45 = vpop.xlane.xlu0 %44
    %v46 = vmul.f32 %v43, 0.03125
    %v47 = vmul.f32 %v45, 0.03125
    %v48 = vadd.f32 %v46, 1e-06
    %v49 = vadd.f32 %v47, 1e-06
    %v50 = vrsqrt.pop %v48
    %v51 = vrsqrt.pop %v49
    %v52 = vld [vmem:[#allocation5] sm:$0x1]
    %v54 = vlaneseq
    %v55 = vshrl.u32 %v54, 7
    %v56 = vsub.s32 0, %v55
    %v57 = vrot.slane %v52, %v56
    %v59 = vmul.f32 %v57, %v38
    %v60 = vmul.f32 %v57, %v39
    %v61 = vmul.f32 %v59, %v50
    %v62 = vmul.f32 %v60, %v51
    %63 = vst [vmem:[#allocation7] sm:$0xff] %v61
    %64 = vst [vmem:[#allocation7 + $0x8] sm:$0xff] %v62
    // Predicated region
    $region18: #{tpu_custom_call.1} parent=1 // pred_check
      _
    $region19: #{tpu_custom_call.1} parent=1 // pred_check_branch
      %66 = sbr.rel (0) target = $region21
    $region20: #{tpu_custom_call.1} parent=1 // pred_region
      %s68 = ssub.s32 256, 256
      %69 = vsyncadd [#allocation4], %s68
      %s70 = sshll.u32 [#allocation7], 4
      %s71 = int_to_ptr.vmem [resolvable:$true] %s70
      %76 = dma.vmem_to_hbm [thread:$0]  %s71, 256, %s2, [#allocation4], 128, 128, 8
    $region21: #{tpu_custom_call.1} parent=1 // pred_fallthru
      _
    // Predicated region
    $region22: #{tpu_custom_call.1} parent=1 // pred_check
      _
    $region23: #{tpu_custom_call.1} parent=1 // pred_check_branch
      %78 = sbr.rel (0) target = $region25
    $region24: #{tpu_custom_call.1} parent=1 // pred_region
      %79 = dma.done [#allocation4], 256
    $region25: #{tpu_custom_call.1} parent=1 // pred_fallthru
      _
    %80 = vsyncpa [#allocation3], 1
    %81 = vsyncpa [#allocation6], 1
    %82 = vsyncpa [#allocation4], 1

</llo_original>
